<compile_context>
chip_gen: v5e
topology: v5e:2x2
jax: 0.10.0
libtpu: 0.0.40
codegen_flags: <defaults>
</compile_context>

<pallas_src>
import jax
import jax.numpy as jnp
from jax.experimental import pallas as pl
from jax.experimental.pallas import tpu as pltpu

HL1, HL2, HL3 = 256, 64, 16
OUT_PAD = 128          # lane-dense output width (multiple of 128)
_BM_CAP = 1024         # batch-tile cap: keeps per-step VMEM well under v5e's 16 MiB


def _approx_sigmoid(z):
    # sigmoid(z) = 1 / (1 + exp(-z)): exp on the EUP, approx reciprocal on the
    # EUP vrcp slot (instead of a Newton divide on the VALU).
    return pl.reciprocal(1.0 + jnp.exp(-z), approx=True)


def _mlp_kernel(x_ref,
                w1_ref, b1_ref,
                w2_ref, b2_ref,
                w3_ref, b3_ref,
                w4_ref, b4_ref,
                o_ref):
    # bf16 operands for the MXU, f32 accumulation + f32 activations.
    x = x_ref[...].astype(jnp.bfloat16)

    # fc1 + sigmoid
    h1 = jnp.dot(x, w1_ref[...], preferred_element_type=jnp.float32) + b1_ref[...]
    h1 = _approx_sigmoid(h1)
    # TODO(synk): nn.Dropout(0.5) is identity in eval mode; training-mode RNG
    # dropout (pltpu.prng_random_bits) intentionally not applied here.

    # fc2 + relu
    h2 = jnp.dot(h1.astype(jnp.bfloat16), w2_ref[...],
                 preferred_element_type=jnp.float32) + b2_ref[...]
    h2 = jnp.maximum(h2, 0.0)

    # fc3 + sigmoid
    h3 = jnp.dot(h2.astype(jnp.bfloat16), w3_ref[...],
                 preferred_element_type=jnp.float32) + b3_ref[...]
    h3 = _approx_sigmoid(h3)

    # fc4 (no activation), padded to a lane-dense 128-wide block.
    o_ref[...] = (jnp.dot(h3.astype(jnp.bfloat16), w4_ref[...],
                          preferred_element_type=jnp.float32)
                  + b4_ref[...]).astype(o_ref.dtype)


def _pick_block_batch(B):
    """Largest batch tile <= cap that divides B, is a multiple of 8, and leaves
    at least 2 grid steps (so v7x can shard the 'parallel' axis across 2 TCs).
    Falls back to a single full-batch step if no such tile exists."""
    best = None
    bm = 8
    while bm <= min(B, _BM_CAP):
        if B % bm == 0 and B // bm >= 2:
            best = bm
        bm += 8
    return best if best is not None else B


def net_forward(x, params, *, block_batch=None):
    """x: (B, F) float32. params: dict of (in,out) f32 weights and (1,out) f32 biases."""
    B, F = x.shape
    OUT = params["w4"].shape[1]
    assert OUT <= OUT_PAD

    bm = _pick_block_batch(B) if block_batch is None else block_batch
    assert B % bm == 0, "block_batch must divide batch"
    assert bm == B or bm % 8 == 0, "block_batch must be a multiple of 8 (sublane align)"

    # bf16 MXU operands; biases stay f32.
    w1 = params["w1"].astype(jnp.bfloat16)
    w2 = params["w2"].astype(jnp.bfloat16)
    w3 = params["w3"].astype(jnp.bfloat16)
    # Pad fc4 to 128 output lanes -> unmasked lane-dense store in the kernel.
    w4 = jnp.zeros((HL3, OUT_PAD), jnp.bfloat16).at[:, :OUT].set(
        params["w4"].astype(jnp.bfloat16))
    b4 = jnp.zeros((1, OUT_PAD), jnp.float32).at[:, :OUT].set(params["b4"])
    b1, b2, b3 = params["b1"], params["b2"], params["b3"]

    full = lambda shape: pl.BlockSpec(shape, lambda i: (0, 0))
    in_specs = [
        pl.BlockSpec((bm, F), lambda i: (i, 0)),        # x: tiled over batch
        full((F, HL1)),      full((1, HL1)),
        full((HL1, HL2)),    full((1, HL2)),
        full((HL2, HL3)),    full((1, HL3)),
        full((HL3, OUT_PAD)), full((1, OUT_PAD)),
    ]
    out_spec = pl.BlockSpec((bm, OUT_PAD), lambda i: (i, 0))

    # Advisory cost for XLA's scheduler.
    flops = 2 * B * (F * HL1 + HL1 * HL2 + HL2 * HL3 + HL3 * OUT_PAD)
    transcendentals = B * (HL1 + HL3)            # exp for the two sigmoids
    bytes_accessed = (
        x.size * x.dtype.itemsize
        + sum(int(a.size) * a.dtype.itemsize for a in (w1, w2, w3, w4, b1, b2, b3, b4))
        + B * OUT_PAD * 4)

    out = pl.pallas_call(
        _mlp_kernel,
        out_shape=jax.ShapeDtypeStruct((B, OUT_PAD), jnp.float32),
        grid_spec=pltpu.PrefetchScalarGridSpec(
            num_scalar_prefetch=0,
            grid=(B // bm,),
            in_specs=in_specs,
            out_specs=out_spec,
        ),
        compiler_params=pltpu.CompilerParams(
            dimension_semantics=("parallel",)),
        cost_estimate=pl.CostEstimate(
            flops=flops,
            transcendentals=transcendentals,
            bytes_accessed=bytes_accessed),
    )(x, w1, b1, w2, b2, w3, b3, w4, b4)

    return out[:, :OUT]


def init_params(key, num_features, num_out):
    """Deterministic init matching nn.Linear shapes (stored as (in, out))."""
    ks = jax.random.split(key, 8)
    def lin(kw, kb, fan_in, fan_out):
        bound = 1.0 / jnp.sqrt(fan_in)
        w = jax.random.uniform(kw, (fan_in, fan_out), jnp.float32, -bound, bound)
        b = jax.random.uniform(kb, (1, fan_out), jnp.float32, -bound, bound)
        return w, b
    w1, b1 = lin(ks[0], ks[1], num_features, HL1)
    w2, b2 = lin(ks[2], ks[3], HL1, HL2)
    w3, b3 = lin(ks[4], ks[5], HL2, HL3)
    w4, b4 = lin(ks[6], ks[7], HL3, num_out)
    return dict(w1=w1, b1=b1, w2=w2, b2=b2, w3=w3, b3=b3, w4=w4, b4=b4)


def _reference(x, p):
    h = jax.nn.sigmoid(x @ p["w1"] + p["b1"])
    h = jnp.maximum(h @ p["w2"] + p["b2"], 0.0)
    h = jax.nn.sigmoid(h @ p["w3"] + p["b3"])
    return h @ p["w4"] + p["b4"]


if __name__ == "__main__":
    key = jax.random.PRNGKey(0)
    k_x, k_p = jax.random.split(key)

    # 256 rows -> block_batch=128, grid=(2,): exercises the batch tiling and
    # gives the 'parallel' axis two steps (dual-TC sharding on v7x).
    batch, num_features, num_out = 256, 32, 8
    x = jax.random.normal(k_x, (batch, num_features), dtype=jnp.float32)
    params = init_params(k_p, num_features, num_out)

    out = net_forward(x, params)
    out = jax.block_until_ready(out)

    ref = _reference(x, params)
    assert out.shape == (batch, num_out)
    # bf16 MXU operands + approx-reciprocal sigmoid -> looser tolerance vs f32 ref.
    assert jnp.allclose(out, ref, atol=2e-2, rtol=2e-2)

    print("KERNEL_OK")
</pallas_src>

<mosaic_0001>
module attributes {stable_mosaic.version = 11 : i64} {
  func.func @_mlp_kernel(%arg0: i32, %arg1: memref<128x32xf32, #tpu.memory_space<vmem>>, %arg2: memref<32x256xbf16, #tpu.memory_space<vmem>>, %arg3: memref<1x256xf32, #tpu.memory_space<vmem>>, %arg4: memref<256x64xbf16, #tpu.memory_space<vmem>>, %arg5: memref<1x64xf32, #tpu.memory_space<vmem>>, %arg6: memref<64x16xbf16, #tpu.memory_space<vmem>>, %arg7: memref<1x16xf32, #tpu.memory_space<vmem>>, %arg8: memref<16x128xbf16, #tpu.memory_space<vmem>>, %arg9: memref<1x128xf32, #tpu.memory_space<vmem>>, %arg10: memref<128x128xf32, #tpu.memory_space<vmem>>) attributes {dimension_semantics = [#tpu.dimension_semantics<parallel>], iteration_bounds = array<i64: 2>, scalar_prefetch = 0 : i64, scratch_operands = 0 : i64, tpu.core_type = #tpu.core_type<tc>, window_params = [{transform_indices = @transform_0, window_bounds = array<i64: 128, 32>}, {pipeline_mode = #tpu.pipeline_mode<synchronous>, transform_indices = @transform_1, window_bounds = array<i64: 32, 256>}, {pipeline_mode = #tpu.pipeline_mode<synchronous>, transform_indices = @transform_2, window_bounds = array<i64: 1, 256>}, {pipeline_mode = #tpu.pipeline_mode<synchronous>, transform_indices = @transform_3, window_bounds = array<i64: 256, 64>}, {pipeline_mode = #tpu.pipeline_mode<synchronous>, transform_indices = @transform_4, window_bounds = array<i64: 1, 64>}, {pipeline_mode = #tpu.pipeline_mode<synchronous>, transform_indices = @transform_5, window_bounds = array<i64: 64, 16>}, {pipeline_mode = #tpu.pipeline_mode<synchronous>, transform_indices = @transform_6, window_bounds = array<i64: 1, 16>}, {pipeline_mode = #tpu.pipeline_mode<synchronous>, transform_indices = @transform_7, window_bounds = array<i64: 16, 128>}, {pipeline_mode = #tpu.pipeline_mode<synchronous>, transform_indices = @transform_8, window_bounds = array<i64: 1, 128>}, {transform_indices = @transform_9, window_bounds = array<i64: 128, 128>}]} {
    %c0 = arith.constant 0 : index
    %c0_0 = arith.constant 0 : index
    %0 = vector.load %arg1[%c0, %c0_0] : memref<128x32xf32, #tpu.memory_space<vmem>>, vector<128x32xf32>
    %1 = arith.truncf %0 : vector<128x32xf32> to vector<128x32xbf16>
    %c0_1 = arith.constant 0 : index
    %c0_2 = arith.constant 0 : index
    %2 = vector.load %arg2[%c0_1, %c0_2] : memref<32x256xbf16, #tpu.memory_space<vmem>>, vector<32x256xbf16>
    %cst = arith.constant dense<0.000000e+00> : vector<128x256xf32>
    %3 = tpu.matmul %1, %2, %cst {dimension_numbers = #tpu.dot_dimension_numbers<[1], [0], [0], [1], [0, 0, 1, 1], [], []>} : vector<128x32xbf16>, vector<32x256xbf16>, vector<128x256xf32> -> vector<128x256xf32>
    %c0_3 = arith.constant 0 : index
    %c0_4 = arith.constant 0 : index
    %4 = vector.load %arg3[%c0_3, %c0_4] : memref<1x256xf32, #tpu.memory_space<vmem>>, vector<1x256xf32>
    %5 = vector.broadcast %4 : vector<1x256xf32> to vector<128x256xf32>
    %6 = arith.addf %3, %5 : vector<128x256xf32>
    %cst_5 = arith.constant 0.000000e+00 : f32
    %7 = vector.broadcast %cst_5 : f32 to vector<128x256xf32>
    %8 = arith.subf %7, %6 : vector<128x256xf32>
    %9 = math.exp %8 : vector<128x256xf32>
    %cst_6 = arith.constant 1.000000e+00 : f32
    %10 = vector.broadcast %cst_6 : f32 to vector<128x256xf32>
    %11 = arith.addf %10, %9 : vector<128x256xf32>
    %12 = tpu.reciprocal %11 {approx = true} : vector<128x256xf32> -> vector<128x256xf32>
    %13 = arith.truncf %12 : vector<128x256xf32> to vector<128x256xbf16>
    %c0_7 = arith.constant 0 : index
    %c0_8 = arith.constant 0 : index
    %14 = vector.load %arg4[%c0_7, %c0_8] : memref<256x64xbf16, #tpu.memory_space<vmem>>, vector<256x64xbf16>
    %cst_9 = arith.constant dense<0.000000e+00> : vector<128x64xf32>
    %15 = tpu.matmul %13, %14, %cst_9 {dimension_numbers = #tpu.dot_dimension_numbers<[1], [0], [0], [1], [0, 0, 1, 1], [], []>} : vector<128x256xbf16>, vector<256x64xbf16>, vector<128x64xf32> -> vector<128x64xf32>
    %c0_10 = arith.constant 0 : index
    %c0_11 = arith.constant 0 : index
    %16 = vector.load %arg5[%c0_10, %c0_11] : memref<1x64xf32, #tpu.memory_space<vmem>>, vector<1x64xf32>
    %17 = vector.broadcast %16 : vector<1x64xf32> to vector<128x64xf32>
    %18 = arith.addf %15, %17 : vector<128x64xf32>
    %cst_12 = arith.constant 0.000000e+00 : f32
    %19 = vector.broadcast %cst_12 : f32 to vector<128x64xf32>
    %20 = arith.maximumf %18, %19 : vector<128x64xf32>
    %21 = arith.truncf %20 : vector<128x64xf32> to vector<128x64xbf16>
    %c0_13 = arith.constant 0 : index
    %c0_14 = arith.constant 0 : index
    %22 = vector.load %arg6[%c0_13, %c0_14] : memref<64x16xbf16, #tpu.memory_space<vmem>>, vector<64x16xbf16>
    %cst_15 = arith.constant dense<0.000000e+00> : vector<128x16xf32>
    %23 = tpu.matmul %21, %22, %cst_15 {dimension_numbers = #tpu.dot_dimension_numbers<[1], [0], [0], [1], [0, 0, 1, 1], [], []>} : vector<128x64xbf16>, vector<64x16xbf16>, vector<128x16xf32> -> vector<128x16xf32>
    %c0_16 = arith.constant 0 : index
    %c0_17 = arith.constant 0 : index
    %24 = vector.load %arg7[%c0_16, %c0_17] : memref<1x16xf32, #tpu.memory_space<vmem>>, vector<1x16xf32>
    %25 = vector.broadcast %24 : vector<1x16xf32> to vector<128x16xf32>
    %26 = arith.addf %23, %25 : vector<128x16xf32>
    %cst_18 = arith.constant 0.000000e+00 : f32
    %27 = vector.broadcast %cst_18 : f32 to vector<128x16xf32>
    %28 = arith.subf %27, %26 : vector<128x16xf32>
    %29 = math.exp %28 : vector<128x16xf32>
    %cst_19 = arith.constant 1.000000e+00 : f32
    %30 = vector.broadcast %cst_19 : f32 to vector<128x16xf32>
    %31 = arith.addf %30, %29 : vector<128x16xf32>
    %32 = tpu.reciprocal %31 {approx = true} : vector<128x16xf32> -> vector<128x16xf32>
    %33 = arith.truncf %32 : vector<128x16xf32> to vector<128x16xbf16>
    %c0_20 = arith.constant 0 : index
    %c0_21 = arith.constant 0 : index
    %34 = vector.load %arg8[%c0_20, %c0_21] : memref<16x128xbf16, #tpu.memory_space<vmem>>, vector<16x128xbf16>
    %cst_22 = arith.constant dense<0.000000e+00> : vector<128x128xf32>
    %35 = tpu.matmul %33, %34, %cst_22 {dimension_numbers = #tpu.dot_dimension_numbers<[1], [0], [0], [1], [0, 0, 1, 1], [], []>} : vector<128x16xbf16>, vector<16x128xbf16>, vector<128x128xf32> -> vector<128x128xf32>
    %c0_23 = arith.constant 0 : index
    %c0_24 = arith.constant 0 : index
    %36 = vector.load %arg9[%c0_23, %c0_24] : memref<1x128xf32, #tpu.memory_space<vmem>>, vector<1x128xf32>
    %37 = vector.broadcast %36 : vector<1x128xf32> to vector<128x128xf32>
    %38 = arith.addf %35, %37 : vector<128x128xf32>
    %c0_25 = arith.constant 0 : index
    %c0_26 = arith.constant 0 : index
    %39 = vector.load %arg10[%c0_25, %c0_26] : memref<128x128xf32, #tpu.memory_space<vmem>>, vector<128x128xf32>
    tpu.vector_store %arg10[%c0_25, %c0_26], %38 {strides = array<i32>} : memref<128x128xf32, #tpu.memory_space<vmem>>, vector<128x128xf32>,
    return
  }
  func.func @transform_0(%arg0: i32) -> (i32, i32) {
    %c0_i32 = arith.constant 0 : i32
    %c0_i32_0 = arith.constant 0 : i32
    return %arg0, %c0_i32 : i32, i32
  }
  func.func @transform_1(%arg0: i32) -> (i32, i32) {
    %c0_i32 = arith.constant 0 : i32
    %c0_i32_0 = arith.constant 0 : i32
    %c0_i32_1 = arith.constant 0 : i32
    return %c0_i32, %c0_i32_0 : i32, i32
  }
  func.func @transform_2(%arg0: i32) -> (i32, i32) {
    %c0_i32 = arith.constant 0 : i32
    %c0_i32_0 = arith.constant 0 : i32
    %c0_i32_1 = arith.constant 0 : i32
    return %c0_i32, %c0_i32_0 : i32, i32
  }
  func.func @transform_3(%arg0: i32) -> (i32, i32) {
    %c0_i32 = arith.constant 0 : i32
    %c0_i32_0 = arith.constant 0 : i32
    %c0_i32_1 = arith.constant 0 : i32
    return %c0_i32, %c0_i32_0 : i32, i32
  }
  func.func @transform_4(%arg0: i32) -> (i32, i32) {
    %c0_i32 = arith.constant 0 : i32
    %c0_i32_0 = arith.constant 0 : i32
    %c0_i32_1 = arith.constant 0 : i32
    return %c0_i32, %c0_i32_0 : i32, i32
  }
  func.func @transform_5(%arg0: i32) -> (i32, i32) {
    %c0_i32 = arith.constant 0 : i32
    %c0_i32_0 = arith.constant 0 : i32
    %c0_i32_1 = arith.constant 0 : i32
    return %c0_i32, %c0_i32_0 : i32, i32
  }
  func.func @transform_6(%arg0: i32) -> (i32, i32) {
    %c0_i32 = arith.constant 0 : i32
    %c0_i32_0 = arith.constant 0 : i32
    %c0_i32_1 = arith.constant 0 : i32
    return %c0_i32, %c0_i32_0 : i32, i32
  }
  func.func @transform_7(%arg0: i32) -> (i32, i32) {
    %c0_i32 = arith.constant 0 : i32
    %c0_i32_0 = arith.constant 0 : i32
    %c0_i32_1 = arith.constant 0 : i32
    return %c0_i32, %c0_i32_0 : i32, i32
  }
  func.func @transform_8(%arg0: i32) -> (i32, i32) {
    %c0_i32 = arith.constant 0 : i32
    %c0_i32_0 = arith.constant 0 : i32
    %c0_i32_1 = arith.constant 0 : i32
    return %c0_i32, %c0_i32_0 : i32, i32
  }
  func.func @transform_9(%arg0: i32) -> (i32, i32) {
    %c0_i32 = arith.constant 0 : i32
    %c0_i32_0 = arith.constant 0 : i32
    return %arg0, %c0_i32 : i32, i32
  }
}

</mosaic_0001>

<llo_original>
// kernel: tpu_custom_call.1
$region0: #{tpu_custom_call.1}
  #allocation0 [shape = 'u32[]', space=smem, size = 0x4, offset = 0x4, fixed_abs, tag = 'smem constant byte address 0x4 - core index']
  #allocation1 [shape = 'u32[72,128]{1,0:T(1,128)}', space=vmem, size = 0x9000, scoped, tag = 'internal scratch']
  %s0 = inlined_call_operand.vmem [shape: f32[256,32], index: 0, kind: input, shape index: {}]
  %s1 = inlined_call_operand.vmem [shape: bf16[32,256], index: 1, kind: input, shape index: {}]
  %s2 = inlined_call_operand.vmem [shape: f32[1,256], index: 2, kind: input, shape index: {}]
  %s3 = inlined_call_operand.vmem [shape: bf16[256,64], index: 3, kind: input, shape index: {}]
  %s4 = inlined_call_operand.vmem [shape: f32[1,64], index: 4, kind: input, shape index: {}]
  %s5 = inlined_call_operand.vmem [shape: bf16[64,16], index: 5, kind: input, shape index: {}]
  %s6 = inlined_call_operand.vmem [shape: f32[1,16], index: 6, kind: input, shape index: {}]
  %s7 = inlined_call_operand.vmem [shape: bf16[16,128], index: 7, kind: input, shape index: {}]
  %s8 = inlined_call_operand.vmem [shape: f32[1,128], index: 8, kind: input, shape index: {}]
  %s9 = inlined_call_operand.hbm [shape: f32[256,128], index: 9, kind: output, shape index: {}]
  %s10 = sld [smem:[#allocation0]]
  $region69: #{tpu_custom_call.1} parent=0
    _
  %s12 = ssub.s32 1, %s10
  %s13 = scalar_select 0, %s12, %s10
  $region1: #{tpu_custom_call.1} parent=0
    #allocation2 [shape = 'u8[131072]{0}', space=vmem, size = 0x20000, scoped, tag = 'output window, operand 0']
    #allocation3 [shape = 's32[2]{0}', space=sflag, size = 0x8, scoped, tag = 'scoped memory for tpu_custom_call.1']
    %14 = vsyncpa [#allocation3], 0
    %s15 = scalar_lea.sflag [#allocation3], 1
    %16 = vsyncpa %s15, 0
    loop: start=0, step=1, limit=4
    $region2: #{tpu_custom_call.1} parent=1 // loop_pre_header
      _
    $region3: #{tpu_custom_call.1} parent=1 // loop_header
      %s18 = sphi 0, %s22
      %p19 = scmp.ge.s32.totalorder %s18, 4
      %s28 = sphi 0, %s30
      %s31 = sphi 0, %s28
      %s32 = sphi 0, %s31
      %s48 = sphi 0, %s32
      %s52 = sphi 0, %s52
      %s54 = sphi 0, %s52
      %s55 = sphi 0, %s54
      %s69 = sphi 0, %s55
      %s73 = sphi 0, %s73
      %s75 = sphi 0, %s73
      %s76 = sphi 0, %s75
      %s90 = sphi 0, %s76
      %s94 = sphi 0, %s94
      %s96 = sphi 0, %s94
      %s97 = sphi 0, %s96
      %s111 = sphi 0, %s97
      %s115 = sphi 0, %s115
      %s117 = sphi 0, %s115
      %s118 = sphi 0, %s117
      %s132 = sphi 0, %s118
      %s136 = sphi 0, %s136
      %s138 = sphi 0, %s136
      %s139 = sphi 0, %s138
      %s153 = sphi 0, %s139
      %s157 = sphi 0, %s157
      %s159 = sphi 0, %s157
      %s160 = sphi 0, %s159
      %s174 = sphi 0, %s160
      %s178 = sphi 0, %s178
      %s180 = sphi 0, %s178
      %s181 = sphi 0, %s180
      %s195 = sphi 0, %s181
      %s199 = sphi 0, %s199
      %s201 = sphi 0, %s199
      %s202 = sphi 0, %s201
      %s216 = sphi 0, %s202
      %s222 = sphi 0, %s224
      %s225 = sphi 0, %s222
      %s226 = sphi 0, %s225
      %s242 = sphi 0, %s226
    $region4: #{tpu_custom_call.1} parent=1 // loop_header_branch
      %21 = sbr.rel (%p19) target = $region8
    $region5: #{tpu_custom_call.1} parent=1 // loop_body
      %s23 = ssub.s32 %s18, 1
      %s24 = ssub.s32 %s18, 2
      %s25 = sadd.s32 %s18, 1
      %s26 = ssub.s32 %s18, %s25
      %p27 = scmp.eq.s32.totalorder %s26, 0
      %s29 = sadd.s32 %s28, 1
      %s30 = scalar_select %p27, %s28, %s29
      %p33 = pneg %p27
      %p34 = scmp.eq.s32.totalorder %s18, 1
      %p35 = por %p33, %p34
      %p36 = scmp.ne.s32.totalorder %s28, %s31
      %p37 = scmp.eq.s32.totalorder %s18, 0
      %p38 = por %p36, %p37
      %p39 = scmp.ne.s32.totalorder %s28, %s31
      %p40 = scmp.eq.s32.totalorder %s23, 1
      %p41 = por %p39, %p40
      %p42 = scmp.ne.s32.totalorder %s31, %s32
      %p43 = scmp.eq.s32.totalorder %s23, 0
      %p44 = por %p42, %p43
      %p45 = scmp.ne.s32.totalorder %s31, %s32
      %p46 = scmp.eq.s32.totalorder %s24, 1
      %p47 = por %p45, %p46
      %p49 = scmp.ne.s32.totalorder %s32, %s48
      %p50 = scmp.eq.s32.totalorder %s24, 0
      %p51 = por %p49, %p50
      %s53 = sadd.s32 %s52, 1
      %p56 = scmp.eq.s32.totalorder %s18, 1
      %p57 = scmp.ne.s32.totalorder %s52, %s54
      %p58 = scmp.eq.s32.totalorder %s18, 0
      %p59 = por %p57, %p58
      %p60 = scmp.ne.s32.totalorder %s52, %s54
      %p61 = scmp.eq.s32.totalorder %s23, 1
      %p62 = por %p60, %p61
      %p63 = scmp.ne.s32.totalorder %s54, %s55
      %p64 = scmp.eq.s32.totalorder %s23, 0
      %p65 = por %p63, %p64
      %p66 = scmp.ne.s32.totalorder %s54, %s55
      %p67 = scmp.eq.s32.totalorder %s24, 1
      %p68 = por %p66, %p67
      %p70 = scmp.ne.s32.totalorder %s55, %s69
      %p71 = scmp.eq.s32.totalorder %s24, 0
      %p72 = por %p70, %p71
      %s74 = sadd.s32 %s73, 1
      %p77 = scmp.eq.s32.totalorder %s18, 1
      %p78 = scmp.ne.s32.totalorder %s73, %s75
      %p79 = scmp.eq.s32.totalorder %s18, 0
      %p80 = por %p78, %p79
      %p81 = scmp.ne.s32.totalorder %s73, %s75
      %p82 = scmp.eq.s32.totalorder %s23, 1
      %p83 = por %p81, %p82
      %p84 = scmp.ne.s32.totalorder %s75, %s76
      %p85 = scmp.eq.s32.totalorder %s23, 0
      %p86 = por %p84, %p85
      %p87 = scmp.ne.s32.totalorder %s75, %s76
      %p88 = scmp.eq.s32.totalorder %s24, 1
      %p89 = por %p87, %p88
      %p91 = scmp.ne.s32.totalorder %s76, %s90
      %p92 = scmp.eq.s32.totalorder %s24, 0
      %p93 = por %p91, %p92
      %s95 = sadd.s32 %s94, 1
      %p98 = scmp.eq.s32.totalorder %s18, 1
      %p99 = scmp.ne.s32.totalorder %s94, %s96
      %p100 = scmp.eq.s32.totalorder %s18, 0
      %p101 = por %p99, %p100
      %p102 = scmp.ne.s32.totalorder %s94, %s96
      %p103 = scmp.eq.s32.totalorder %s23, 1
      %p104 = por %p102, %p103
      %p105 = scmp.ne.s32.totalorder %s96, %s97
      %p106 = scmp.eq.s32.totalorder %s23, 0
      %p107 = por %p105, %p106
      %p108 = scmp.ne.s32.totalorder %s96, %s97
      %p109 = scmp.eq.s32.totalorder %s24, 1
      %p110 = por %p108, %p109
      %p112 = scmp.ne.s32.totalorder %s97, %s111
      %p113 = scmp.eq.s32.totalorder %s24, 0
      %p114 = por %p112, %p113
      %s116 = sadd.s32 %s115, 1
      %p119 = scmp.eq.s32.totalorder %s18, 1
      %p120 = scmp.ne.s32.totalorder %s115, %s117
      %p121 = scmp.eq.s32.totalorder %s18, 0
      %p122 = por %p120, %p121
      %p123 = scmp.ne.s32.totalorder %s115, %s117
      %p124 = scmp.eq.s32.totalorder %s23, 1
      %p125 = por %p123, %p124
      %p126 = scmp.ne.s32.totalorder %s117, %s118
      %p127 = scmp.eq.s32.totalorder %s23, 0
      %p128 = por %p126, %p127
      %p129 = scmp.ne.s32.totalorder %s117, %s118
      %p130 = scmp.eq.s32.totalorder %s24, 1
      %p131 = por %p129, %p130
      %p133 = scmp.ne.s32.totalorder %s118, %s132
      %p134 = scmp.eq.s32.totalorder %s24, 0
      %p135 = por %p133, %p134
      %s137 = sadd.s32 %s136, 1
      %p140 = scmp.eq.s32.totalorder %s18, 1
      %p141 = scmp.ne.s32.totalorder %s136, %s138
      %p142 = scmp.eq.s32.totalorder %s18, 0
      %p143 = por %p141, %p142
      %p144 = scmp.ne.s32.totalorder %s136, %s138
      %p145 = scmp.eq.s32.totalorder %s23, 1
      %p146 = por %p144, %p145
      %p147 = scmp.ne.s32.totalorder %s138, %s139
      %p148 = scmp.eq.s32.totalorder %s23, 0
      %p149 = por %p147, %p148
      %p150 = scmp.ne.s32.totalorder %s138, %s139
      %p151 = scmp.eq.s32.totalorder %s24, 1
      %p152 = por %p150, %p151
      %p154 = scmp.ne.s32.totalorder %s139, %s153
      %p155 = scmp.eq.s32.totalorder %s24, 0
      %p156 = por %p154, %p155
      %s158 = sadd.s32 %s157, 1
      %p161 = scmp.eq.s32.totalorder %s18, 1
      %p162 = scmp.ne.s32.totalorder %s157, %s159
      %p163 = scmp.eq.s32.totalorder %s18, 0
      %p164 = por %p162, %p163
      %p165 = scmp.ne.s32.totalorder %s157, %s159
      %p166 = scmp.eq.s32.totalorder %s23, 1
      %p167 = por %p165, %p166
      %p168 = scmp.ne.s32.totalorder %s159, %s160
      %p169 = scmp.eq.s32.totalorder %s23, 0
      %p170 = por %p168, %p169
      %p171 = scmp.ne.s32.totalorder %s159, %s160
      %p172 = scmp.eq.s32.totalorder %s24, 1
      %p173 = por %p171, %p172
      %p175 = scmp.ne.s32.totalorder %s160, %s174
      %p176 = scmp.eq.s32.totalorder %s24, 0
      %p177 = por %p175, %p176
      %s179 = sadd.s32 %s178, 1
      %p182 = scmp.eq.s32.totalorder %s18, 1
      %p183 = scmp.ne.s32.totalorder %s178, %s180
      %p184 = scmp.eq.s32.totalorder %s18, 0
      %p185 = por %p183, %p184
      %p186 = scmp.ne.s32.totalorder %s178, %s180
      %p187 = scmp.eq.s32.totalorder %s23, 1
      %p188 = por %p186, %p187
      %p189 = scmp.ne.s32.totalorder %s180, %s181
      %p190 = scmp.eq.s32.totalorder %s23, 0
      %p191 = por %p189, %p190
      %p192 = scmp.ne.s32.totalorder %s180, %s181
      %p193 = scmp.eq.s32.totalorder %s24, 1
      %p194 = por %p192, %p193
      %p196 = scmp.ne.s32.totalorder %s181, %s195
      %p197 = scmp.eq.s32.totalorder %s24, 0
      %p198 = por %p196, %p197
      %s200 = sadd.s32 %s199, 1
      %p203 = scmp.eq.s32.totalorder %s18, 1
      %p204 = scmp.ne.s32.totalorder %s199, %s201
      %p205 = scmp.eq.s32.totalorder %s18, 0
      %p206 = por %p204, %p205
      %p207 = scmp.ne.s32.totalorder %s199, %s201
      %p208 = scmp.eq.s32.totalorder %s23, 1
      %p209 = por %p207, %p208
      %p210 = scmp.ne.s32.totalorder %s201, %s202
      %p211 = scmp.eq.s32.totalorder %s23, 0
      %p212 = por %p210, %p211
      %p213 = scmp.ne.s32.totalorder %s201, %s202
      %p214 = scmp.eq.s32.totalorder %s24, 1
      %p215 = por %p213, %p214
      %p217 = scmp.ne.s32.totalorder %s202, %s216
      %p218 = scmp.eq.s32.totalorder %s24, 0
      %p219 = por %p217, %p218
      %s220 = ssub.s32 %s18, %s25
      %p221 = scmp.eq.s32.totalorder %s220, 0
      %s223 = sadd.s32 %s222, 1
      %s224 = scalar_select %p221, %s222, %s223
      %p227 = pneg %p221
      %p228 = scmp.eq.s32.totalorder %s18, 1
      %p229 = por %p227, %p228
      %p230 = scmp.ne.s32.totalorder %s222, %s225
      %p231 = scmp.eq.s32.totalorder %s18, 0
      %p232 = por %p230, %p231
      %p233 = scmp.ne.s32.totalorder %s222, %s225
      %p234 = scmp.eq.s32.totalorder %s23, 1
      %p235 = por %p233, %p234
      %p236 = scmp.ne.s32.totalorder %s225, %s226
      %p237 = scmp.eq.s32.totalorder %s23, 0
      %p238 = por %p236, %p237
      %p239 = scmp.ne.s32.totalorder %s225, %s226
      %p240 = scmp.eq.s32.totalorder %s24, 1
      %p241 = por %p239, %p240
      %p243 = scmp.ne.s32.totalorder %s226, %s242
      %p244 = scmp.eq.s32.totalorder %s24, 0
      %p245 = por %p243, %p244
      %p246 = scmp.le.s32.totalorder 1, %s18
      %p247 = scmp.lt.s32.totalorder %s18, 3
      %p248 = pnand %p246, %p247
      %p249 = pneg %p248
      // Predicated region
      $region9: #{tpu_custom_call.1} parent=5 // pred_check
        _
      $region10: #{tpu_custom_call.1} parent=5 // pred_check_branch
        %251 = sbr.rel (%p248) target = $region12
      $region11: #{tpu_custom_call.1} parent=5 // pred_region
        %s252 = ssub.s32 %s18, 1
        // Predicated region
        $region13: #{tpu_custom_call.1} parent=11 // pred_check
          %p253 = pneg %p65
        $region14: #{tpu_custom_call.1} parent=11 // pred_check_branch
          %255 = sbr.rel (%p253) target = $region16
        $region15: #{tpu_custom_call.1} parent=11 // pred_region
          _
        $region16: #{tpu_custom_call.1} parent=11 // pred_fallthru
          _
        // Predicated region
        $region17: #{tpu_custom_call.1} parent=11 // pred_check
          %p256 = pneg %p86
        $region18: #{tpu_custom_call.1} parent=11 // pred_check_branch
          %258 = sbr.rel (%p256) target = $region20
        $region19: #{tpu_custom_call.1} parent=11 // pred_region
          _
        $region20: #{tpu_custom_call.1} parent=11 // pred_fallthru
          _
        // Predicated region
        $region21: #{tpu_custom_call.1} parent=11 // pred_check
          %p259 = pneg %p107
        $region22: #{tpu_custom_call.1} parent=11 // pred_check_branch
          %261 = sbr.rel (%p259) target = $region24
        $region23: #{tpu_custom_call.1} parent=11 // pred_region
          _
        $region24: #{tpu_custom_call.1} parent=11 // pred_fallthru
          _
        // Predicated region
        $region25: #{tpu_custom_call.1} parent=11 // pred_check
          %p262 = pneg %p128
        $region26: #{tpu_custom_call.1} parent=11 // pred_check_branch
          %264 = sbr.rel (%p262) target = $region28
        $region27: #{tpu_custom_call.1} parent=11 // pred_region
          _
        $region28: #{tpu_custom_call.1} parent=11 // pred_fallthru
          _
        // Predicated region
        $region29: #{tpu_custom_call.1} parent=11 // pred_check
          %p265 = pneg %p149
        $region30: #{tpu_custom_call.1} parent=11 // pred_check_branch
          %267 = sbr.rel (%p265) target = $region32
        $region31: #{tpu_custom_call.1} parent=11 // pred_region
          _
        $region32: #{tpu_custom_call.1} parent=11 // pred_fallthru
          _
        // Predicated region
        $region33: #{tpu_custom_call.1} parent=11 // pred_check
          %p268 = pneg %p170
        $region34: #{tpu_custom_call.1} parent=11 // pred_check_branch
          %270 = sbr.rel (%p268) target = $region36
        $region35: #{tpu_custom_call.1} parent=11 // pred_region
          _
        $region36: #{tpu_custom_call.1} parent=11 // pred_fallthru
          _
        // Predicated region
        $region37: #{tpu_custom_call.1} parent=11 // pred_check
          %p271 = pneg %p191
        $region38: #{tpu_custom_call.1} parent=11 // pred_check_branch
          %273 = sbr.rel (%p271) target = $region40
        $region39: #{tpu_custom_call.1} parent=11 // pred_region
          _
        $region40: #{tpu_custom_call.1} parent=11 // pred_fallthru
          _
        // Predicated region
        $region41: #{tpu_custom_call.1} parent=11 // pred_check
          %p274 = pneg %p212
        $region42: #{tpu_custom_call.1} parent=11 // pred_check_branch
          %276 = sbr.rel (%p274) target = $region44
        $region43: #{tpu_custom_call.1} parent=11 // pred_region
          _
        $region44: #{tpu_custom_call.1} parent=11 // pred_fallthru
          _
      $region12: #{tpu_custom_call.1} parent=5 // pred_fallthru
        _
      %p277 = scmp.lt.s32.totalorder %s18, 2
      // Predicated region
      $region45: #{tpu_custom_call.1} parent=5 // pred_check
        %p278 = pneg %p277
      $region46: #{tpu_custom_call.1} parent=5 // pred_check_branch
        %280 = sbr.rel (%p278) target = $region48
      $region47: #{tpu_custom_call.1} parent=5 // pred_region
        // Predicated region
        $region49: #{tpu_custom_call.1} parent=47 // pred_check
          %p281 = pneg %p38
        $region50: #{tpu_custom_call.1} parent=47 // pred_check_branch
          %283 = sbr.rel (%p281) target = $region52
        $region51: #{tpu_custom_call.1} parent=47 // pred_region
          %s284 = smul.u32 16, %s18
          %p285 = scmp.lt.s32.totalorder %s284, 31
          %s286 = scalar_select %p285, %s284, 31
          %s287 = smul.addr %s286, 8
          %s288 = scalar_lea.vmem %s0, %s287
          %s289 = smul.u32 16, %s18
        $region52: #{tpu_custom_call.1} parent=47 // pred_fallthru
          _
      $region48: #{tpu_custom_call.1} parent=5 // pred_fallthru
        _
      %p290 = scmp.le.s32.totalorder 1, %s18
      %p291 = scmp.lt.s32.totalorder %s18, 3
      %p292 = pnand %p290, %p291
      %p293 = pneg %p292
      // Predicated region
      $region53: #{tpu_custom_call.1} parent=5 // pred_check
        _
      $region54: #{tpu_custom_call.1} parent=5 // pred_check_branch
        %295 = sbr.rel (%p292) target = $region56
      $region55: #{tpu_custom_call.1} parent=5 // pred_region
        %s296 = ssub.s32 %s18, 1
        %s297 = smul.u32 16, %s23
        %p298 = scmp.lt.s32.totalorder %s297, 31
        %s299 = scalar_select %p298, %s297, 31
        %s300 = smul.addr %s299, 8
        %s301 = scalar_lea.vmem %s0, %s300
        %p302 = pneg %p44
        %p303 = pneg %p41
        %p304 = pneg %p65
        %p305 = pneg %p62
        %p306 = pneg %p86
        %p307 = pneg %p83
        %p308 = pneg %p107
        %p309 = pneg %p104
        %p310 = pneg %p128
        %p311 = pneg %p125
        %p312 = pneg %p149
        %p313 = pneg %p146
        %p314 = pneg %p170
        %p315 = pneg %p167
        %p316 = pneg %p191
        %p317 = pneg %p188
        %p318 = pneg %p212
        %p319 = pneg %p209
        %p320 = pneg %p238
        %p321 = pneg %p235
        %s322 = sand.u32 %s225, 1
        %s323 = scalar_lea.sflag [#allocation3], %s322
        %s324 = sand.u32 %s225, 1
        %s325 = smul.addr %s324, 128
        %s326 = scalar_lea.vmem [#allocation2], %s325
        %s327 = smul.u32 16, %s23
        %p328 = scmp.lt.s32.totalorder %s327, 31
        %s329 = scalar_select %p328, %s327, 31
        %s330 = smul.addr %s329, 8
        %s331 = scalar_lea.vmem %s0, %s330
        %s332 = smul.u32 16, %s23
        %s333 = smul.u32 16, %s23
        %v335 = vld [vmem:[%s331] sm:$0xff]
        %v336 = vld [vmem:[%s331 + $0x8] sm:$0xff]
        %v337 = vld [vmem:[%s331 + $0x10] sm:$0xff]
        %v338 = vld [vmem:[%s331 + $0x18] sm:$0xff]
        %v339 = vld [vmem:[%s331 + $0x20] sm:$0xff]
        %v340 = vld [vmem:[%s331 + $0x28] sm:$0xff]
        %v341 = vld [vmem:[%s331 + $0x30] sm:$0xff]
        %v342 = vld [vmem:[%s331 + $0x38] sm:$0xff]
        %v343 = vld [vmem:[%s331 + $0x40] sm:$0xff]
        %v344 = vld [vmem:[%s331 + $0x48] sm:$0xff]
        %v345 = vld [vmem:[%s331 + $0x50] sm:$0xff]
        %v346 = vld [vmem:[%s331 + $0x58] sm:$0xff]
        %v347 = vld [vmem:[%s331 + $0x60] sm:$0xff]
        %v348 = vld [vmem:[%s331 + $0x68] sm:$0xff]
        %v349 = vld [vmem:[%s331 + $0x70] sm:$0xff]
        %v350 = vld [vmem:[%s331 + $0x78] sm:$0xff]
        %v351 = vpack.c.bf16 %v336, %v335
        %v352 = vpack.c.bf16 %v338, %v337
        %v353 = vpack.c.bf16 %v340, %v339
        %v354 = vpack.c.bf16 %v342, %v341
        %v355 = vpack.c.bf16 %v344, %v343
        %v356 = vpack.c.bf16 %v346, %v345
        %v357 = vpack.c.bf16 %v348, %v347
        %v358 = vpack.c.bf16 %v350, %v349
        %v359 = vld [vmem:[%s1] sm:$0xff]
        %v360 = vld [vmem:[%s1 + $0x8] sm:$0xff]
        %v361 = vld [vmem:[%s1 + $0x10] sm:$0xff]
        %v362 = vld [vmem:[%s1 + $0x18] sm:$0xff]
        %v363 = vld [vmem:[%s2] sm:$0x3]
        %v365 = vperm.slane %v363, 0
        %v366 = vperm.slane %v363, 1
        %v373 = vunpack.c.l.b16 %v359
        %v374 = vunpack.c.h.b16 %v359
        %v375 = vunpack.c.l.b16 %v360
        %v376 = vunpack.c.h.b16 %v360
        %v377 = vunpack.c.l.b16 %v361
        %v378 = vunpack.c.h.b16 %v361
        %v379 = vunpack.c.l.b16 %v362
        %v380 = vunpack.c.h.b16 %v362
        %v381 = vpack.c.b16 %v375, %v373
        %v382 = vpack.c.b16 %v376, %v374
        %v383 = vpack.c.b16 %v379, %v377
        %v384 = vpack.c.b16 %v380, %v378
        %vm389 = vcmask 261120
        %v391 = vsel %vm389, %v351, 0
        %v394 = vsel %vm389, %v352, 0
        %v397 = vsel %vm389, %v353, 0
        %v400 = vsel %vm389, %v354, 0
        %v403 = vsel %vm389, %v355, 0
        %v406 = vsel %vm389, %v356, 0
        %v409 = vsel %vm389, %v357, 0
        %v412 = vsel %vm389, %v358, 0
        %414 = vmatpush.bf16.msra.mxu0 0
        %415 = vmatpush.bf16.msra.mxu0 0
        %416 = vmatpush.bf16.msra.mxu0 0
        %417 = vmatpush.bf16.msra.mxu0 0
        %418 = vmatpush.bf16.msra.mxu0 0
        %419 = vmatpush.bf16.msra.mxu0 0
        %420 = vmatpush.bf16.msra.mxu0 %v383
        %421 = vmatpush.bf16.msra.mxu0 %v381
        %422 = vmatmul.bf16.gmra.mxu0 %v391
        %v423 = vpop.f32.mrf.mxu0
        %v424 = vadd.f32 %v365, %v423
        %v425 = vpop.f32.mrf.mxu0
        %v426 = vadd.f32 %v365, %v425
        %427 = vmatmul.bf16.gmra.mxu0 %v394
        %v428 = vpop.f32.mrf.mxu0
        %v429 = vadd.f32 %v365, %v428
        %v430 = vpop.f32.mrf.mxu0
        %v431 = vadd.f32 %v365, %v430
        %432 = vmatmul.bf16.gmra.mxu0 %v397
        %v433 = vpop.f32.mrf.mxu0
        %v434 = vadd.f32 %v365, %v433
        %v435 = vpop.f32.mrf.mxu0
        %v436 = vadd.f32 %v365, %v435
        %437 = vmatmul.bf16.gmra.mxu0 %v400
        %v438 = vpop.f32.mrf.mxu0
        %v439 = vadd.f32 %v365, %v438
        %v440 = vpop.f32.mrf.mxu0
        %v441 = vadd.f32 %v365, %v440
        %442 = vmatmul.bf16.gmra.mxu0 %v403
        %v443 = vpop.f32.mrf.mxu0
        %v444 = vadd.f32 %v365, %v443
        %v445 = vpop.f32.mrf.mxu0
        %v446 = vadd.f32 %v365, %v445
        %447 = vmatmul.bf16.gmra.mxu0 %v406
        %v448 = vpop.f32.mrf.mxu0
        %v449 = vadd.f32 %v365, %v448
        %v450 = vpop.f32.mrf.mxu0
        %v451 = vadd.f32 %v365, %v450
        %452 = vmatmul.bf16.gmra.mxu0 %v409
        %v453 = vpop.f32.mrf.mxu0
        %v454 = vadd.f32 %v365, %v453
        %v455 = vpop.f32.mrf.mxu0
        %v456 = vadd.f32 %v365, %v455
        %457 = vmatmul.bf16.gmra.mxu0 %v412
        %v458 = vpop.f32.mrf.mxu0
        %v459 = vadd.f32 %v365, %v458
        %v460 = vpop.f32.mrf.mxu0
        %v461 = vadd.f32 %v365, %v460
        %462 = vdwg.mxu0
        %463 = vmatpush.bf16.msra.mxu0 0
        %464 = vmatpush.bf16.msra.mxu0 0
        %465 = vmatpush.bf16.msra.mxu0 0
        %466 = vmatpush.bf16.msra.mxu0 0
        %467 = vmatpush.bf16.msra.mxu0 0
        %468 = vmatpush.bf16.msra.mxu0 0
        %469 = vmatpush.bf16.msra.mxu0 %v384
        %470 = vmatpush.bf16.msra.mxu0 %v382
        %471 = vmatmul.bf16.gmra.mxu0 %v391
        %v472 = vpop.f32.mrf.mxu0
        %v473 = vadd.f32 %v366, %v472
        %v474 = vpop.f32.mrf.mxu0
        %v475 = vadd.f32 %v366, %v474
        %476 = vmatmul.bf16.gmra.mxu0 %v394
        %v477 = vpop.f32.mrf.mxu0
        %v478 = vadd.f32 %v366, %v477
        %v479 = vpop.f32.mrf.mxu0
        %v480 = vadd.f32 %v366, %v479
        %481 = vmatmul.bf16.gmra.mxu0 %v397
        %v482 = vpop.f32.mrf.mxu0
        %v483 = vadd.f32 %v366, %v482
        %v484 = vpop.f32.mrf.mxu0
        %v485 = vadd.f32 %v366, %v484
        %486 = vmatmul.bf16.gmra.mxu0 %v400
        %v487 = vpop.f32.mrf.mxu0
        %v488 = vadd.f32 %v366, %v487
        %v489 = vpop.f32.mrf.mxu0
        %v490 = vadd.f32 %v366, %v489
        %491 = vmatmul.bf16.gmra.mxu0 %v403
        %v492 = vpop.f32.mrf.mxu0
        %v493 = vadd.f32 %v366, %v492
        %v494 = vpop.f32.mrf.mxu0
        %v495 = vadd.f32 %v366, %v494
        %496 = vmatmul.bf16.gmra.mxu0 %v406
        %v497 = vpop.f32.mrf.mxu0
        %v498 = vadd.f32 %v366, %v497
        %v499 = vpop.f32.mrf.mxu0
        %v500 = vadd.f32 %v366, %v499
        %501 = vmatmul.bf16.gmra.mxu0 %v409
        %v502 = vpop.f32.mrf.mxu0
        %v503 = vadd.f32 %v366, %v502
        %v504 = vpop.f32.mrf.mxu0
        %v505 = vadd.f32 %v366, %v504
        %506 = vmatmul.bf16.gmra.mxu0 %v412
        %v507 = vpop.f32.mrf.mxu0
        %v508 = vadd.f32 %v366, %v507
        %v509 = vpop.f32.mrf.mxu0
        %v510 = vadd.f32 %v366, %v509
        %511 = vdwg.mxu0
        %v512 = vsub.f32 0.0, %v424
        %v513 = vsub.f32 0.0, %v473
        %v514 = vsub.f32 0.0, %v426
        %v515 = vsub.f32 0.0, %v475
        %v516 = vsub.f32 0.0, %v429
        %v517 = vsub.f32 0.0, %v478
        %v518 = vsub.f32 0.0, %v431
        %v519 = vsub.f32 0.0, %v480
        %v520 = vsub.f32 0.0, %v434
        %v521 = vsub.f32 0.0, %v483
        %v522 = vsub.f32 0.0, %v436
        %v523 = vsub.f32 0.0, %v485
        %v524 = vsub.f32 0.0, %v439
        %v525 = vsub.f32 0.0, %v488
        %v526 = vsub.f32 0.0, %v441
        %v527 = vsub.f32 0.0, %v490
        %v528 = vsub.f32 0.0, %v444
        %v529 = vsub.f32 0.0, %v493
        %v530 = vsub.f32 0.0, %v446
        %v531 = vsub.f32 0.0, %v495
        %v532 = vsub.f32 0.0, %v449
        %v533 = vsub.f32 0.0, %v498
        %v534 = vsub.f32 0.0, %v451
        %v535 = vsub.f32 0.0, %v500
        %v536 = vsub.f32 0.0, %v454
        %v537 = vsub.f32 0.0, %v503
        %v538 = vsub.f32 0.0, %v456
        %v539 = vsub.f32 0.0, %v505
        %v540 = vsub.f32 0.0, %v459
        %v541 = vsub.f32 0.0, %v508
        %v542 = vsub.f32 0.0, %v461
        %v543 = vsub.f32 0.0, %v510
        %v544 = vmul.f32 %v512, 1.442695
        %v545 = vpow.pop %v544
        %v546 = vmul.f32 %v513, 1.442695
        %v547 = vpow.pop %v546
        %v548 = vmul.f32 %v514, 1.442695
        %v549 = vpow.pop %v548
        %v550 = vmul.f32 %v515, 1.442695
        %v551 = vpow.pop %v550
        %v552 = vmul.f32 %v516, 1.442695
        %v553 = vpow.pop %v552
        %v554 = vmul.f32 %v517, 1.442695
        %v555 = vpow.pop %v554
        %v556 = vmul.f32 %v518, 1.442695
        %v557 = vpow.pop %v556
        %v558 = vmul.f32 %v519, 1.442695
        %v559 = vpow.pop %v558
        %v560 = vmul.f32 %v520, 1.442695
        %v561 = vpow.pop %v560
        %v562 = vmul.f32 %v521, 1.442695
        %v563 = vpow.pop %v562
        %v564 = vmul.f32 %v522, 1.442695
        %v565 = vpow.pop %v564
        %v566 = vmul.f32 %v523, 1.442695
        %v567 = vpow.pop %v566
        %v568 = vmul.f32 %v524, 1.442695
        %v569 = vpow.pop %v568
        %v570 = vmul.f32 %v525, 1.442695
        %v571 = vpow.pop %v570
        %v572 = vmul.f32 %v526, 1.442695
        %v573 = vpow.pop %v572
        %v574 = vmul.f32 %v527, 1.442695
        %v575 = vpow.pop %v574
        %v576 = vmul.f32 %v528, 1.442695
        %v577 = vpow.pop %v576
        %v578 = vmul.f32 %v529, 1.442695
        %v579 = vpow.pop %v578
        %v580 = vmul.f32 %v530, 1.442695
        %v581 = vpow.pop %v580
        %v582 = vmul.f32 %v531, 1.442695
        %v583 = vpow.pop %v582
        %v584 = vmul.f32 %v532, 1.442695
        %v585 = vpow.pop %v584
        %v586 = vmul.f32 %v533, 1.442695
        %v587 = vpow.pop %v586
        %v588 = vmul.f32 %v534, 1.442695
        %v589 = vpow.pop %v588
        %v590 = vmul.f32 %v535, 1.442695
        %v591 = vpow.pop %v590
        %v592 = vmul.f32 %v536, 1.442695
        %v593 = vpow.pop %v592
        %v594 = vmul.f32 %v537, 1.442695
        %v595 = vpow.pop %v594
        %v596 = vmul.f32 %v538, 1.442695
        %v597 = vpow.pop %v596
        %v598 = vmul.f32 %v539, 1.442695
        %v599 = vpow.pop %v598
        %v600 = vmul.f32 %v540, 1.442695
        %v601 = vpow.pop %v600
        %v602 = vmul.f32 %v541, 1.442695
        %v603 = vpow.pop %v602
        %v604 = vmul.f32 %v542, 1.442695
        %v605 = vpow.pop %v604
        %v606 = vmul.f32 %v543, 1.442695
        %v607 = vpow.pop %v606
        %v608 = vadd.f32 %v545, 1.0
        %v609 = vadd.f32 %v547, 1.0
        %v610 = vadd.f32 %v549, 1.0
        %v611 = vadd.f32 %v551, 1.0
        %v612 = vadd.f32 %v553, 1.0
        %v613 = vadd.f32 %v555, 1.0
        %v614 = vadd.f32 %v557, 1.0
        %v615 = vadd.f32 %v559, 1.0
        %v616 = vadd.f32 %v561, 1.0
        %v617 = vadd.f32 %v563, 1.0
        %v618 = vadd.f32 %v565, 1.0
        %v619 = vadd.f32 %v567, 1.0
        %v620 = vadd.f32 %v569, 1.0
        %v621 = vadd.f32 %v571, 1.0
        %v622 = vadd.f32 %v573, 1.0
        %v623 = vadd.f32 %v575, 1.0
        %v624 = vadd.f32 %v577, 1.0
        %v625 = vadd.f32 %v579, 1.0
        %v626 = vadd.f32 %v581, 1.0
        %v627 = vadd.f32 %v583, 1.0
        %v628 = vadd.f32 %v585, 1.0
        %v629 = vadd.f32 %v587, 1.0
        %v630 = vadd.f32 %v589, 1.0
        %v631 = vadd.f32 %v591, 1.0
        %v632 = vadd.f32 %v593, 1.0
        %v633 = vadd.f32 %v595, 1.0
        %v634 = vadd.f32 %v597, 1.0
        %v635 = vadd.f32 %v599, 1.0
        %v636 = vadd.f32 %v601, 1.0
        %v637 = vadd.f32 %v603, 1.0
        %v638 = vadd.f32 %v605, 1.0
        %v639 = vadd.f32 %v607, 1.0
        %v640 = vrcp.pop %v608
        %v641 = vrcp.pop %v609
        %v642 = vrcp.pop %v610
        %v643 = vrcp.pop %v611
        %v644 = vrcp.pop %v612
        %v645 = vrcp.pop %v613
        %v646 = vrcp.pop %v614
        %v647 = vrcp.pop %v615
        %v648 = vrcp.pop %v616
        %v649 = vrcp.pop %v617
        %v650 = vrcp.pop %v618
        %v651 = vrcp.pop %v619
        %v652 = vrcp.pop %v620
        %v653 = vrcp.pop %v621
        %v654 = vrcp.pop %v622
        %v655 = vrcp.pop %v623
        %v656 = vrcp.pop %v624
        %v657 = vrcp.pop %v625
        %v658 = vrcp.pop %v626
        %v659 = vrcp.pop %v627
        %v660 = vrcp.pop %v628
        %v661 = vrcp.pop %v629
        %v662 = vrcp.pop %v630
        %v663 = vrcp.pop %v631
        %v664 = vrcp.pop %v632
        %v665 = vrcp.pop %v633
        %v666 = vrcp.pop %v634
        %v667 = vrcp.pop %v635
        %v668 = vrcp.pop %v636
        %v669 = vrcp.pop %v637
        %v670 = vrcp.pop %v638
        %v671 = vrcp.pop %v639
        %v672 = vpack.c.bf16 %v642, %v640
        %v673 = vpack.c.bf16 %v643, %v641
        %v674 = vpack.c.bf16 %v646, %v644
        %v675 = vpack.c.bf16 %v647, %v645
        %v676 = vpack.c.bf16 %v650, %v648
        %v677 = vpack.c.bf16 %v651, %v649
        %v678 = vpack.c.bf16 %v654, %v652
        %v679 = vpack.c.bf16 %v655, %v653
        %v680 = vpack.c.bf16 %v658, %v656
        %v681 = vpack.c.bf16 %v659, %v657
        %v682 = vpack.c.bf16 %v662, %v660
        %v683 = vpack.c.bf16 %v663, %v661
        %v684 = vpack.c.bf16 %v666, %v664
        %v685 = vpack.c.bf16 %v667, %v665
        %v686 = vpack.c.bf16 %v670, %v668
        %v687 = vpack.c.bf16 %v671, %v669
        %v688 = vld [vmem:[%s3] sm:$0xf]
        %v689 = vld [vmem:[%s3 + $0x4] sm:$0xf]
        %v690 = vld [vmem:[%s3 + $0x8] sm:$0xf]
        %v691 = vld [vmem:[%s3 + $0xc] sm:$0xf]
        %v692 = vld [vmem:[%s3 + $0x10] sm:$0xf]
        %v693 = vld [vmem:[%s3 + $0x14] sm:$0xf]
        %v694 = vld [vmem:[%s3 + $0x18] sm:$0xf]
        %v695 = vld [vmem:[%s3 + $0x1c] sm:$0xf]
        %v696 = vld [vmem:[%s3 + $0x20] sm:$0xf]
        %v697 = vld [vmem:[%s3 + $0x24] sm:$0xf]
        %v698 = vld [vmem:[%s3 + $0x28] sm:$0xf]
        %v699 = vld [vmem:[%s3 + $0x2c] sm:$0xf]
        %v700 = vld [vmem:[%s3 + $0x30] sm:$0xf]
        %v701 = vld [vmem:[%s3 + $0x34] sm:$0xf]
        %v702 = vld [vmem:[%s3 + $0x38] sm:$0xf]
        %v703 = vld [vmem:[%s3 + $0x3c] sm:$0xf]
        %v704 = vld [vmem:[%s3 + $0x40] sm:$0xf]
        %v705 = vld [vmem:[%s3 + $0x44] sm:$0xf]
        %v706 = vld [vmem:[%s3 + $0x48] sm:$0xf]
        %v707 = vld [vmem:[%s3 + $0x4c] sm:$0xf]
        %v708 = vld [vmem:[%s3 + $0x50] sm:$0xf]
        %v709 = vld [vmem:[%s3 + $0x54] sm:$0xf]
        %v710 = vld [vmem:[%s3 + $0x58] sm:$0xf]
        %v711 = vld [vmem:[%s3 + $0x5c] sm:$0xf]
        %v712 = vld [vmem:[%s3 + $0x60] sm:$0xf]
        %v713 = vld [vmem:[%s3 + $0x64] sm:$0xf]
        %v714 = vld [vmem:[%s3 + $0x68] sm:$0xf]
        %v715 = vld [vmem:[%s3 + $0x6c] sm:$0xf]
        %v716 = vld [vmem:[%s3 + $0x70] sm:$0xf]
        %v717 = vld [vmem:[%s3 + $0x74] sm:$0xf]
        %v718 = vld [vmem:[%s3 + $0x78] sm:$0xf]
        %v719 = vld [vmem:[%s3 + $0x7c] sm:$0xf]
        %v720 = vld [vmem:[%s4] sm:$0x1]
        %v722 = vperm.slane %v720, 0
        %v756 = vunpack.c.l.b16 %v688
        %v757 = vunpack.c.l.b16 %v689
        %v758 = vunpack.c.l.b16 %v690
        %v759 = vunpack.c.l.b16 %v691
        %v760 = vunpack.c.l.b16 %v692
        %v761 = vunpack.c.l.b16 %v693
        %v762 = vunpack.c.l.b16 %v694
        %v763 = vunpack.c.l.b16 %v695
        %v764 = vunpack.c.l.b16 %v696
        %v765 = vunpack.c.l.b16 %v697
        %v766 = vunpack.c.l.b16 %v698
        %v767 = vunpack.c.l.b16 %v699
        %v768 = vunpack.c.l.b16 %v700
        %v769 = vunpack.c.l.b16 %v701
        %v770 = vunpack.c.l.b16 %v702
        %v771 = vunpack.c.l.b16 %v703
        %v772 = vunpack.c.l.b16 %v704
        %v773 = vunpack.c.l.b16 %v705
        %v774 = vunpack.c.l.b16 %v706
        %v775 = vunpack.c.l.b16 %v707
        %v776 = vunpack.c.l.b16 %v708
        %v777 = vunpack.c.l.b16 %v709
        %v778 = vunpack.c.l.b16 %v710
        %v779 = vunpack.c.l.b16 %v711
        %v780 = vunpack.c.l.b16 %v712
        %v781 = vunpack.c.l.b16 %v713
        %v782 = vunpack.c.l.b16 %v714
        %v783 = vunpack.c.l.b16 %v715
        %v784 = vunpack.c.l.b16 %v716
        %v785 = vunpack.c.l.b16 %v717
        %v786 = vunpack.c.l.b16 %v718
        %v787 = vunpack.c.l.b16 %v719
        %v788 = vpack.c.b16 %v757, %v756
        %v789 = vpack.c.b16 %v759, %v758
        %v790 = vpack.c.b16 %v761, %v760
        %v791 = vpack.c.b16 %v763, %v762
        %v792 = vpack.c.b16 %v765, %v764
        %v793 = vpack.c.b16 %v767, %v766
        %v794 = vpack.c.b16 %v769, %v768
        %v795 = vpack.c.b16 %v771, %v770
        %v796 = vpack.c.b16 %v773, %v772
        %v797 = vpack.c.b16 %v775, %v774
        %v798 = vpack.c.b16 %v777, %v776
        %v799 = vpack.c.b16 %v779, %v778
        %v800 = vpack.c.b16 %v781, %v780
        %v801 = vpack.c.b16 %v783, %v782
        %v802 = vpack.c.b16 %v785, %v784
        %v803 = vpack.c.b16 %v787, %v786
        %820 = vmatpush.bf16.msra.mxu0 %v795
        %821 = vmatpush.bf16.msra.mxu0 %v794
        %822 = vmatpush.bf16.msra.mxu0 %v793
        %823 = vmatpush.bf16.msra.mxu0 %v792
        %824 = vmatpush.bf16.msra.mxu0 %v791
        %825 = vmatpush.bf16.msra.mxu0 %v790
        %826 = vmatpush.bf16.msra.mxu0 %v789
        %827 = vmatpush.bf16.msra.mxu0 %v788
        %828 = vmatmul.bf16.gmra.mxu0 %v672
        %v829 = vpop.f32.mrf.mxu0
        %v830 = vadd.f32 %v722, %v829
        %v831 = vpop.f32.mrf.mxu0
        %v832 = vadd.f32 %v722, %v831
        %833 = vmatmul.bf16.gmra.mxu0 %v674
        %v834 = vpop.f32.mrf.mxu0
        %v835 = vadd.f32 %v722, %v834
        %v836 = vpop.f32.mrf.mxu0
        %v837 = vadd.f32 %v722, %v836
        %838 = vmatmul.bf16.gmra.mxu0 %v676
        %v839 = vpop.f32.mrf.mxu0
        %v840 = vadd.f32 %v722, %v839
        %v841 = vpop.f32.mrf.mxu0
        %v842 = vadd.f32 %v722, %v841
        %843 = vmatmul.bf16.gmra.mxu0 %v678
        %v844 = vpop.f32.mrf.mxu0
        %v845 = vadd.f32 %v722, %v844
        %v846 = vpop.f32.mrf.mxu0
        %v847 = vadd.f32 %v722, %v846
        %848 = vmatmul.bf16.gmra.mxu0 %v680
        %v849 = vpop.f32.mrf.mxu0
        %v850 = vadd.f32 %v722, %v849
        %v851 = vpop.f32.mrf.mxu0
        %v852 = vadd.f32 %v722, %v851
        %853 = vmatmul.bf16.gmra.mxu0 %v682
        %v854 = vpop.f32.mrf.mxu0
        %v855 = vadd.f32 %v722, %v854
        %v856 = vpop.f32.mrf.mxu0
        %v857 = vadd.f32 %v722, %v856
        %858 = vmatmul.bf16.gmra.mxu0 %v684
        %v859 = vpop.f32.mrf.mxu0
        %v860 = vadd.f32 %v722, %v859
        %v861 = vpop.f32.mrf.mxu0
        %v862 = vadd.f32 %v722, %v861
        %863 = vmatmul.bf16.gmra.mxu0 %v686
        %v864 = vpop.f32.mrf.mxu0
        %v865 = vadd.f32 %v722, %v864
        %v866 = vpop.f32.mrf.mxu0
        %v867 = vadd.f32 %v722, %v866
        %868 = vdwg.mxu0
        %869 = vmatpush.bf16.msra.mxu0 %v803
        %870 = vmatpush.bf16.msra.mxu0 %v802
        %871 = vmatpush.bf16.msra.mxu0 %v801
        %872 = vmatpush.bf16.msra.mxu0 %v800
        %873 = vmatpush.bf16.msra.mxu0 %v799
        %874 = vmatpush.bf16.msra.mxu0 %v798
        %875 = vmatpush.bf16.msra.mxu0 %v797
        %876 = vmatpush.bf16.msra.mxu0 %v796
        %877 = vmatmul.bf16.gmra.mxu0 %v673
        %v878 = vpop.f32.mrf.mxu0
        %v879 = vadd.f32 %v830, %v878
        %v880 = vpop.f32.mrf.mxu0
        %v881 = vadd.f32 %v832, %v880
        %882 = vmatmul.bf16.gmra.mxu0 %v675
        %v883 = vpop.f32.mrf.mxu0
        %v884 = vadd.f32 %v835, %v883
        %v885 = vpop.f32.mrf.mxu0
        %v886 = vadd.f32 %v837, %v885
        %887 = vmatmul.bf16.gmra.mxu0 %v677
        %v888 = vpop.f32.mrf.mxu0
        %v889 = vadd.f32 %v840, %v888
        %v890 = vpop.f32.mrf.mxu0
        %v891 = vadd.f32 %v842, %v890
        %892 = vmatmul.bf16.gmra.mxu0 %v679
        %v893 = vpop.f32.mrf.mxu0
        %v894 = vadd.f32 %v845, %v893
        %v895 = vpop.f32.mrf.mxu0
        %v896 = vadd.f32 %v847, %v895
        %897 = vmatmul.bf16.gmra.mxu0 %v681
        %v898 = vpop.f32.mrf.mxu0
        %v899 = vadd.f32 %v850, %v898
        %v900 = vpop.f32.mrf.mxu0
        %v901 = vadd.f32 %v852, %v900
        %902 = vmatmul.bf16.gmra.mxu0 %v683
        %v903 = vpop.f32.mrf.mxu0
        %v904 = vadd.f32 %v855, %v903
        %v905 = vpop.f32.mrf.mxu0
        %v906 = vadd.f32 %v857, %v905
        %907 = vmatmul.bf16.gmra.mxu0 %v685
        %v908 = vpop.f32.mrf.mxu0
        %v909 = vadd.f32 %v860, %v908
        %v910 = vpop.f32.mrf.mxu0
        %v911 = vadd.f32 %v862, %v910
        %912 = vmatmul.bf16.gmra.mxu0 %v687
        %v913 = vpop.f32.mrf.mxu0
        %v914 = vadd.f32 %v865, %v913
        %v915 = vpop.f32.mrf.mxu0
        %v916 = vadd.f32 %v867, %v915
        %917 = vdwg.mxu0
        %v918 = vmax.f32 %v879, 0.0
        %v919 = vmax.f32 %v881, 0.0
        %v920 = vmax.f32 %v884, 0.0
        %v921 = vmax.f32 %v886, 0.0
        %v922 = vmax.f32 %v889, 0.0
        %v923 = vmax.f32 %v891, 0.0
        %v924 = vmax.f32 %v894, 0.0
        %v925 = vmax.f32 %v896, 0.0
        %v926 = vmax.f32 %v899, 0.0
        %v927 = vmax.f32 %v901, 0.0
        %v928 = vmax.f32 %v904, 0.0
        %v929 = vmax.f32 %v906, 0.0
        %v930 = vmax.f32 %v909, 0.0
        %v931 = vmax.f32 %v911, 0.0
        %v932 = vmax.f32 %v914, 0.0
        %v933 = vmax.f32 %v916, 0.0
        %v934 = vpack.c.bf16 %v919, %v918
        %v935 = vpack.c.bf16 %v921, %v920
        %v936 = vpack.c.bf16 %v923, %v922
        %v937 = vpack.c.bf16 %v925, %v924
        %v938 = vpack.c.bf16 %v927, %v926
        %v939 = vpack.c.bf16 %v929, %v928
        %v940 = vpack.c.bf16 %v931, %v930
        %v941 = vpack.c.bf16 %v933, %v932
        %v942 = vld [vmem:[%s5] sm:$0xf]
        %v943 = vld [vmem:[%s5 + $0x4] sm:$0xf]
        %v944 = vld [vmem:[%s5 + $0x8] sm:$0xf]
        %v945 = vld [vmem:[%s5 + $0xc] sm:$0xf]
        %v946 = vld [vmem:[%s5 + $0x10] sm:$0xf]
        %v947 = vld [vmem:[%s5 + $0x14] sm:$0xf]
        %v948 = vld [vmem:[%s5 + $0x18] sm:$0xf]
        %v949 = vld [vmem:[%s5 + $0x1c] sm:$0xf]
        %v950 = vld [vmem:[%s6] sm:$0x1]
        %v952 = vperm.slane %v950, 0
        %v962 = vunpack.c.l.b16 %v942
        %v963 = vunpack.c.l.b16 %v943
        %v964 = vunpack.c.l.b16 %v944
        %v965 = vunpack.c.l.b16 %v945
        %v966 = vunpack.c.l.b16 %v946
        %v967 = vunpack.c.l.b16 %v947
        %v968 = vunpack.c.l.b16 %v948
        %v969 = vunpack.c.l.b16 %v949
        %v970 = vpack.c.b16 %v963, %v962
        %v971 = vpack.c.b16 %v965, %v964
        %v972 = vpack.c.b16 %v967, %v966
        %v973 = vpack.c.b16 %v969, %v968
        %vm978 = vcmask 523264
        %v980 = vsel %vm978, %v934, 0
        %v983 = vsel %vm978, %v935, 0
        %v986 = vsel %vm978, %v936, 0
        %v989 = vsel %vm978, %v937, 0
        %v992 = vsel %vm978, %v938, 0
        %v995 = vsel %vm978, %v939, 0
        %v998 = vsel %vm978, %v940, 0
        %v1001 = vsel %vm978, %v941, 0
        %1003 = vmatpush.bf16.msra.mxu0 0
        %1004 = vmatpush.bf16.msra.mxu0 0
        %1005 = vmatpush.bf16.msra.mxu0 0
        %1006 = vmatpush.bf16.msra.mxu0 0
        %1007 = vmatpush.bf16.msra.mxu0 %v973
        %1008 = vmatpush.bf16.msra.mxu0 %v972
        %1009 = vmatpush.bf16.msra.mxu0 %v971
        %1010 = vmatpush.bf16.msra.mxu0 %v970
        %1011 = vmatmul.bf16.gmra.mxu0 %v980
        %v1012 = vpop.f32.mrf.mxu0
        %v1013 = vadd.f32 %v952, %v1012
        %v1014 = vpop.f32.mrf.mxu0
        %v1015 = vadd.f32 %v952, %v1014
        %1016 = vmatmul.bf16.gmra.mxu0 %v983
        %v1017 = vpop.f32.mrf.mxu0
        %v1018 = vadd.f32 %v952, %v1017
        %v1019 = vpop.f32.mrf.mxu0
        %v1020 = vadd.f32 %v952, %v1019
        %1021 = vmatmul.bf16.gmra.mxu0 %v986
        %v1022 = vpop.f32.mrf.mxu0
        %v1023 = vadd.f32 %v952, %v1022
        %v1024 = vpop.f32.mrf.mxu0
        %v1025 = vadd.f32 %v952, %v1024
        %1026 = vmatmul.bf16.gmra.mxu0 %v989
        %v1027 = vpop.f32.mrf.mxu0
        %v1028 = vadd.f32 %v952, %v1027
        %v1029 = vpop.f32.mrf.mxu0
        %v1030 = vadd.f32 %v952, %v1029
        %1031 = vmatmul.bf16.gmra.mxu0 %v992
        %v1032 = vpop.f32.mrf.mxu0
        %v1033 = vadd.f32 %v952, %v1032
        %v1034 = vpop.f32.mrf.mxu0
        %v1035 = vadd.f32 %v952, %v1034
        %1036 = vmatmul.bf16.gmra.mxu0 %v995
        %v1037 = vpop.f32.mrf.mxu0
        %v1038 = vadd.f32 %v952, %v1037
        %v1039 = vpop.f32.mrf.mxu0
        %v1040 = vadd.f32 %v952, %v1039
        %1041 = vmatmul.bf16.gmra.mxu0 %v998
        %v1042 = vpop.f32.mrf.mxu0
        %v1043 = vadd.f32 %v952, %v1042
        %v1044 = vpop.f32.mrf.mxu0
        %v1045 = vadd.f32 %v952, %v1044
        %1046 = vmatmul.bf16.gmra.mxu0 %v1001
        %v1047 = vpop.f32.mrf.mxu0
        %v1048 = vadd.f32 %v952, %v1047
        %v1049 = vpop.f32.mrf.mxu0
        %v1050 = vadd.f32 %v952, %v1049
        %1051 = vdwg.mxu0
        %v1052 = vsub.f32 0.0, %v1013
        %v1053 = vsub.f32 0.0, %v1015
        %v1054 = vsub.f32 0.0, %v1018
        %v1055 = vsub.f32 0.0, %v1020
        %v1056 = vsub.f32 0.0, %v1023
        %v1057 = vsub.f32 0.0, %v1025
        %v1058 = vsub.f32 0.0, %v1028
        %v1059 = vsub.f32 0.0, %v1030
        %v1060 = vsub.f32 0.0, %v1033
        %v1061 = vsub.f32 0.0, %v1035
        %v1062 = vsub.f32 0.0, %v1038
        %v1063 = vsub.f32 0.0, %v1040
        %v1064 = vsub.f32 0.0, %v1043
        %v1065 = vsub.f32 0.0, %v1045
        %v1066 = vsub.f32 0.0, %v1048
        %v1067 = vsub.f32 0.0, %v1050
        %v1068 = vmul.f32 %v1052, 1.442695
        %v1069 = vpow.pop %v1068
        %v1070 = vmul.f32 %v1053, 1.442695
        %v1071 = vpow.pop %v1070
        %v1072 = vmul.f32 %v1054, 1.442695
        %v1073 = vpow.pop %v1072
        %v1074 = vmul.f32 %v1055, 1.442695
        %v1075 = vpow.pop %v1074
        %v1076 = vmul.f32 %v1056, 1.442695
        %v1077 = vpow.pop %v1076
        %v1078 = vmul.f32 %v1057, 1.442695
        %v1079 = vpow.pop %v1078
        %v1080 = vmul.f32 %v1058, 1.442695
        %v1081 = vpow.pop %v1080
        %v1082 = vmul.f32 %v1059, 1.442695
        %v1083 = vpow.pop %v1082
        %v1084 = vmul.f32 %v1060, 1.442695
        %v1085 = vpow.pop %v1084
        %v1086 = vmul.f32 %v1061, 1.442695
        %v1087 = vpow.pop %v1086
        %v1088 = vmul.f32 %v1062, 1.442695
        %v1089 = vpow.pop %v1088
        %v1090 = vmul.f32 %v1063, 1.442695
        %v1091 = vpow.pop %v1090
        %v1092 = vmul.f32 %v1064, 1.442695
        %v1093 = vpow.pop %v1092
        %v1094 = vmul.f32 %v1065, 1.442695
        %v1095 = vpow.pop %v1094
        %v1096 = vmul.f32 %v1066, 1.442695
        %v1097 = vpow.pop %v1096
        %v1098 = vmul.f32 %v1067, 1.442695
        %v1099 = vpow.pop %v1098
        %v1100 = vadd.f32 %v1069, 1.0
        %v1101 = vadd.f32 %v1071, 1.0
        %v1102 = vadd.f32 %v1073, 1.0
        %v1103 = vadd.f32 %v1075, 1.0
        %v1104 = vadd.f32 %v1077, 1.0
        %v1105 = vadd.f32 %v1079, 1.0
        %v1106 = vadd.f32 %v1081, 1.0
        %v1107 = vadd.f32 %v1083, 1.0
        %v1108 = vadd.f32 %v1085, 1.0
        %v1109 = vadd.f32 %v1087, 1.0
        %v1110 = vadd.f32 %v1089, 1.0
        %v1111 = vadd.f32 %v1091, 1.0
        %v1112 = vadd.f32 %v1093, 1.0
        %v1113 = vadd.f32 %v1095, 1.0
        %v1114 = vadd.f32 %v1097, 1.0
        %v1115 = vadd.f32 %v1099, 1.0
        %v1116 = vrcp.pop %v1100
        %v1117 = vrcp.pop %v1101
        %v1118 = vrcp.pop %v1102
        %v1119 = vrcp.pop %v1103
        %v1120 = vrcp.pop %v1104
        %v1121 = vrcp.pop %v1105
        %v1122 = vrcp.pop %v1106
        %v1123 = vrcp.pop %v1107
        %v1124 = vrcp.pop %v1108
        %v1125 = vrcp.pop %v1109
        %v1126 = vrcp.pop %v1110
        %v1127 = vrcp.pop %v1111
        %v1128 = vrcp.pop %v1112
        %v1129 = vrcp.pop %v1113
        %v1130 = vrcp.pop %v1114
        %v1131 = vrcp.pop %v1115
        %v1132 = vpack.c.bf16 %v1117, %v1116
        %v1133 = vpack.c.bf16 %v1119, %v1118
        %v1134 = vpack.c.bf16 %v1121, %v1120
        %v1135 = vpack.c.bf16 %v1123, %v1122
        %v1136 = vpack.c.bf16 %v1125, %v1124
        %v1137 = vpack.c.bf16 %v1127, %v1126
        %v1138 = vpack.c.bf16 %v1129, %v1128
        %v1139 = vpack.c.bf16 %v1131, %v1130
        %v1140 = vld [vmem:[%s7] sm:$0xf]
        %v1141 = vld [vmem:[%s7 + $0x4] sm:$0xf]
        %v1142 = vld [vmem:[%s8] sm:$0x1]
        %v1144 = vperm.slane %v1142, 0
        %v1148 = vunpack.c.l.b16 %v1140
        %v1149 = vunpack.c.l.b16 %v1141
        %v1150 = vpack.c.b16 %v1149, %v1148
        %vm1152 = vcmask 130048
        %v1154 = vsel %vm1152, %v1132, 0
        %v1157 = vsel %vm1152, %v1133, 0
        %v1160 = vsel %vm1152, %v1134, 0
        %v1163 = vsel %vm1152, %v1135, 0
        %v1166 = vsel %vm1152, %v1136, 0
        %v1169 = vsel %vm1152, %v1137, 0
        %v1172 = vsel %vm1152, %v1138, 0
        %v1175 = vsel %vm1152, %v1139, 0
        %1177 = vmatpush.bf16.msra.mxu0 0
        %1178 = vmatpush.bf16.msra.mxu0 0
        %1179 = vmatpush.bf16.msra.mxu0 0
        %1180 = vmatpush.bf16.msra.mxu0 0
        %1181 = vmatpush.bf16.msra.mxu0 0
        %1182 = vmatpush.bf16.msra.mxu0 0
        %1183 = vmatpush.bf16.msra.mxu0 0
        %1184 = vmatpush.bf16.msra.mxu0 %v1150
        %1185 = vmatmul.bf16.gmra.mxu0 %v1154
        %v1186 = vpop.f32.mrf.mxu0
        %v1187 = vadd.f32 %v1144, %v1186
        %v1188 = vpop.f32.mrf.mxu0
        %v1189 = vadd.f32 %v1144, %v1188
        %1190 = vmatmul.bf16.gmra.mxu0 %v1157
        %v1191 = vpop.f32.mrf.mxu0
        %v1192 = vadd.f32 %v1144, %v1191
        %v1193 = vpop.f32.mrf.mxu0
        %v1194 = vadd.f32 %v1144, %v1193
        %1195 = vmatmul.bf16.gmra.mxu0 %v1160
        %v1196 = vpop.f32.mrf.mxu0
        %v1197 = vadd.f32 %v1144, %v1196
        %v1198 = vpop.f32.mrf.mxu0
        %v1199 = vadd.f32 %v1144, %v1198
        %1200 = vmatmul.bf16.gmra.mxu0 %v1163
        %v1201 = vpop.f32.mrf.mxu0
        %v1202 = vadd.f32 %v1144, %v1201
        %v1203 = vpop.f32.mrf.mxu0
        %v1204 = vadd.f32 %v1144, %v1203
        %1205 = vmatmul.bf16.gmra.mxu0 %v1166
        %v1206 = vpop.f32.mrf.mxu0
        %v1207 = vadd.f32 %v1144, %v1206
        %v1208 = vpop.f32.mrf.mxu0
        %v1209 = vadd.f32 %v1144, %v1208
        %1210 = vmatmul.bf16.gmra.mxu0 %v1169
        %v1211 = vpop.f32.mrf.mxu0
        %v1212 = vadd.f32 %v1144, %v1211
        %v1213 = vpop.f32.mrf.mxu0
        %v1214 = vadd.f32 %v1144, %v1213
        %1215 = vmatmul.bf16.gmra.mxu0 %v1172
        %v1216 = vpop.f32.mrf.mxu0
        %v1217 = vadd.f32 %v1144, %v1216
        %v1218 = vpop.f32.mrf.mxu0
        %v1219 = vadd.f32 %v1144, %v1218
        %1220 = vmatmul.bf16.gmra.mxu0 %v1175
        %v1221 = vpop.f32.mrf.mxu0
        %v1222 = vadd.f32 %v1144, %v1221
        %v1223 = vpop.f32.mrf.mxu0
        %v1224 = vadd.f32 %v1144, %v1223
        %1225 = vdwg.mxu0
        %1226 = vst [vmem:[%s326] sm:$0xff] %v1187
        %1227 = vst [vmem:[%s326 + $0x8] sm:$0xff] %v1189
        %1228 = vst [vmem:[%s326 + $0x10] sm:$0xff] %v1192
        %1229 = vst [vmem:[%s326 + $0x18] sm:$0xff] %v1194
        %1230 = vst [vmem:[%s326 + $0x20] sm:$0xff] %v1197
        %1231 = vst [vmem:[%s326 + $0x28] sm:$0xff] %v1199
        %1232 = vst [vmem:[%s326 + $0x30] sm:$0xff] %v1202
        %1233 = vst [vmem:[%s326 + $0x38] sm:$0xff] %v1204
        %1234 = vst [vmem:[%s326 + $0x40] sm:$0xff] %v1207
        %1235 = vst [vmem:[%s326 + $0x48] sm:$0xff] %v1209
        %1236 = vst [vmem:[%s326 + $0x50] sm:$0xff] %v1212
        %1237 = vst [vmem:[%s326 + $0x58] sm:$0xff] %v1214
        %1238 = vst [vmem:[%s326 + $0x60] sm:$0xff] %v1217
        %1239 = vst [vmem:[%s326 + $0x68] sm:$0xff] %v1219
        %1240 = vst [vmem:[%s326 + $0x70] sm:$0xff] %v1222
        %1241 = vst [vmem:[%s326 + $0x78] sm:$0xff] %v1224
        %s1242 = sand.u32 %s225, 1
        %s1243 = scalar_lea.sflag [#allocation3], %s1242
        %s1244 = sand.u32 %s225, 1
        %s1245 = smul.addr %s1244, 128
        %s1246 = scalar_lea.vmem [#allocation2], %s1245
        // Predicated region
        $region57: #{tpu_custom_call.1} parent=55 // pred_check
          %p1247 = pneg %p235
        $region58: #{tpu_custom_call.1} parent=55 // pred_check_branch
          %1249 = sbr.rel (%p1247) target = $region60
        $region59: #{tpu_custom_call.1} parent=55 // pred_region
          %s1250 = smul.u32 16, %s23
          %1252 = vsyncadd %s1243, 0
          %s1253 = smul.addr %s1250, 8
          %s1254 = scalar_lea.hbm %s9, %s1253
          %s1255 = sshll.u32 %s1246, 4
          %s1256 = int_to_ptr.vmem [resolvable:$true] %s1255
          %s1257 = sshll.u32 %s1254, 4
          %s1258 = int_to_ptr.hbm [resolvable:$true] %s1257
          %1263 = dma.vmem_to_hbm [thread:$0]  %s1256, 2048, %s1258, %s1243, 128, 128, 8
        $region60: #{tpu_custom_call.1} parent=55 // pred_fallthru
          _
      $region56: #{tpu_custom_call.1} parent=5 // pred_fallthru
        _
      %p1264 = scmp.le.s32.totalorder 2, %s18
      // Predicated region
      $region61: #{tpu_custom_call.1} parent=5 // pred_check
        %p1265 = pneg %p1264
      $region62: #{tpu_custom_call.1} parent=5 // pred_check_branch
        %1267 = sbr.rel (%p1265) target = $region64
      $region63: #{tpu_custom_call.1} parent=5 // pred_region
        %s1268 = ssub.s32 %s18, 2
        // Predicated region
        $region65: #{tpu_custom_call.1} parent=63 // pred_check
          %p1269 = pneg %p241
        $region66: #{tpu_custom_call.1} parent=63 // pred_check_branch
          %1271 = sbr.rel (%p1269) target = $region68
        $region67: #{tpu_custom_call.1} parent=63 // pred_region
          %s1272 = sand.u32 %s226, 1
          %s1273 = scalar_lea.sflag [#allocation3], %s1272
          %s1274 = sand.u32 %s226, 1
          %s1275 = smul.addr %s1274, 128
          %s1276 = scalar_lea.vmem [#allocation2], %s1275
          %1278 = dma.done %s1273, 2048
        $region68: #{tpu_custom_call.1} parent=63 // pred_fallthru
          _
      $region64: #{tpu_custom_call.1} parent=5 // pred_fallthru
        _
    $region6: #{tpu_custom_call.1} parent=1 // loop_footer
      %s22 = sadd.s32 1, %s18
    $region7: #{tpu_custom_call.1} parent=1 // loop_footer_branch
      %17 = sbr.rel target = $region3
    $region8: #{tpu_custom_call.1} parent=1 // loop_exit
      _
    %1279 = vsyncpa [#allocation3], 1
    %s1280 = scalar_lea.sflag [#allocation3], 1
    %1281 = vsyncpa %s1280, 1

</llo_original>
